<compile_context>
chip_gen: v7x
topology: tpu7x:2x2x1
jax: 0.10.0
libtpu: 0.0.40
codegen_flags: <defaults>
</compile_context>

<pallas_src>
import functools

import jax
import jax.numpy as jnp
from jax.experimental import pallas as pl
from jax.experimental.pallas import tpu as pltpu


def _linear_kernel(w_ref, b_ref, xt_ref, yt_ref):
    # w_ref : (OUT_F, IN_F) f32 in SMEM  (PyTorch layout, scalar reads)
    # b_ref : (OUT_F,)      f32 in SMEM
    # xt_ref: (IN_F, TM)    f32 in VMEM  (lane axis = batch rows -> lane dense)
    # yt_ref: (OUT_F, TM)   f32 in VMEM
    xt = xt_ref[...]
    out_f = yt_ref.shape[0]
    in_f = xt_ref.shape[0]

    rows = []
    for o in range(out_f):                    # static unroll: out_f == 2
        acc = w_ref[o, 0] * xt[0:1, :]
        for k in range(1, in_f):              # static unroll: in_f == 3
            acc = acc + w_ref[o, k] * xt[k:k + 1, :]
        rows.append(acc + b_ref[o])
    # Single full-tile, unmasked-lane store.
    yt_ref[...] = jnp.concatenate(rows, axis=0).astype(yt_ref.dtype)


@functools.partial(jax.jit, static_argnames=("block_n",))
def linear_forward(x, weight, bias, *, block_n=1024):
    """y = x @ weight.T + bias.

    x: (N, in_f) f32; weight: (out_f, in_f) f32 (PyTorch layout); bias: (out_f,) f32.
    """
    n, in_f = x.shape
    out_f = weight.shape[0]

    # Lane-dense plumbing: put the batch dimension on the lane axis.
    xt = x.T  # (in_f, n)

    if n <= block_n:
        tm = n            # single block; block dim == full dim satisfies tiling rule
    else:
        tm = block_n      # multiple of 128; uneven final block is masked by Pallas

    grid = (pl.cdiv(n, tm),)

    yt = pl.pallas_call(
        _linear_kernel,
        out_shape=jax.ShapeDtypeStruct((out_f, n), jnp.float32),
        grid=grid,
        in_specs=[
            pl.BlockSpec(memory_space=pltpu.MemorySpace.SMEM),   # weight (2, 3)
            pl.BlockSpec(memory_space=pltpu.MemorySpace.SMEM),   # bias   (2,)
            pl.BlockSpec((in_f, tm), lambda i: (0, i)),          # x^T tile
        ],
        out_specs=pl.BlockSpec((out_f, tm), lambda i: (0, i)),   # y^T tile
        compiler_params=pltpu.CompilerParams(
            dimension_semantics=("parallel",),                   # megacore sharding
        ),
    )(weight, bias, xt)

    return yt.T  # (n, out_f)


if __name__ == "__main__":
    key = jax.random.PRNGKey(0)
    kx, kw, kb, kx2 = jax.random.split(key, 4)

    # Module shapes: Linear(in_features=3, out_features=2)
    N, IN_F, OUT_F = 8, 3, 2

    # Deterministic parameter init (mimics PyTorch Linear's U(-1/sqrt(in), 1/sqrt(in)))
    bound = 1.0 / jnp.sqrt(jnp.float32(IN_F))
    weight = jax.random.uniform(kw, (OUT_F, IN_F), jnp.float32, -bound, bound)
    bias = jax.random.uniform(kb, (OUT_F,), jnp.float32, -bound, bound)

    # Small-batch check (single full-block path).
    x = jax.random.normal(kx, (N, IN_F), jnp.float32)
    y = linear_forward(x, weight, bias)
    jax.block_until_ready(y)
    y_ref = x @ weight.T + bias
    assert y.shape == (N, OUT_F)
    assert jnp.allclose(y, y_ref, atol=1e-5, rtol=1e-5)

    # Larger batch exercises the tiled, parallel grid path (grid=(3,), TM=1024,
    # final block masked).
    N2 = 2560
    x2 = jax.random.normal(kx2, (N2, IN_F), jnp.float32)
    y2 = linear_forward(x2, weight, bias)
    jax.block_until_ready(y2)
    y2_ref = x2 @ weight.T + bias
    assert y2.shape == (N2, OUT_F)
    assert jnp.allclose(y2, y2_ref, atol=1e-5, rtol=1e-5)

    print("KERNEL_OK")
</pallas_src>

<mosaic_0001>
module attributes {stable_mosaic.version = 11 : i64} {
  func.func @_linear_kernel(%arg0: i32, %arg1: memref<2x3xf32, #tpu.memory_space<smem>>, %arg2: memref<2xf32, #tpu.memory_space<smem>>, %arg3: memref<3x8xf32, #tpu.memory_space<vmem>>, %arg4: memref<2x8xf32, #tpu.memory_space<vmem>>) attributes {dimension_semantics = [#tpu.dimension_semantics<parallel>], iteration_bounds = array<i64: 1>, scalar_prefetch = 0 : i64, scratch_operands = 0 : i64, tpu.core_type = #tpu.core_type<tc>, window_params = [{transform_indices = @transform_0, window_bounds = array<i64: 2, 3>}, {transform_indices = @transform_1, window_bounds = array<i64: 2>}, {transform_indices = @transform_2, window_bounds = array<i64: 3, 8>}, {transform_indices = @transform_3, window_bounds = array<i64: 2, 8>}]} {
    %c0 = arith.constant 0 : index
    %c0_0 = arith.constant 0 : index
    %0 = vector.load %arg3[%c0, %c0_0] : memref<3x8xf32, #tpu.memory_space<vmem>>, vector<3x8xf32>
    %c0_1 = arith.constant 0 : index
    %c0_2 = arith.constant 0 : index
    %1 = memref.load %arg1[%c0_1, %c0_2] : memref<2x3xf32, #tpu.memory_space<smem>>
    %2 = vector.extract_strided_slice %0 {offsets = [0, 0], sizes = [1, 8], strides = [1, 1]} : vector<3x8xf32> to vector<1x8xf32>
    %3 = vector.broadcast %1 : f32 to vector<1x8xf32>
    %4 = arith.mulf %3, %2 : vector<1x8xf32>
    %c0_3 = arith.constant 0 : index
    %c1 = arith.constant 1 : index
    %5 = memref.load %arg1[%c0_3, %c1] : memref<2x3xf32, #tpu.memory_space<smem>>
    %6 = vector.extract_strided_slice %0 {offsets = [1, 0], sizes = [1, 8], strides = [1, 1]} : vector<3x8xf32> to vector<1x8xf32>
    %7 = vector.broadcast %5 : f32 to vector<1x8xf32>
    %8 = arith.mulf %7, %6 : vector<1x8xf32>
    %9 = arith.addf %4, %8 : vector<1x8xf32>
    %c0_4 = arith.constant 0 : index
    %c2 = arith.constant 2 : index
    %10 = memref.load %arg1[%c0_4, %c2] : memref<2x3xf32, #tpu.memory_space<smem>>
    %11 = vector.extract_strided_slice %0 {offsets = [2, 0], sizes = [1, 8], strides = [1, 1]} : vector<3x8xf32> to vector<1x8xf32>
    %12 = vector.broadcast %10 : f32 to vector<1x8xf32>
    %13 = arith.mulf %12, %11 : vector<1x8xf32>
    %14 = arith.addf %9, %13 : vector<1x8xf32>
    %c0_5 = arith.constant 0 : index
    %15 = memref.load %arg2[%c0_5] : memref<2xf32, #tpu.memory_space<smem>>
    %16 = vector.broadcast %15 : f32 to vector<1x8xf32>
    %17 = arith.addf %14, %16 : vector<1x8xf32>
    %c1_6 = arith.constant 1 : index
    %c0_7 = arith.constant 0 : index
    %18 = memref.load %arg1[%c1_6, %c0_7] : memref<2x3xf32, #tpu.memory_space<smem>>
    %19 = vector.extract_strided_slice %0 {offsets = [0, 0], sizes = [1, 8], strides = [1, 1]} : vector<3x8xf32> to vector<1x8xf32>
    %20 = vector.broadcast %18 : f32 to vector<1x8xf32>
    %21 = arith.mulf %20, %19 : vector<1x8xf32>
    %c1_8 = arith.constant 1 : index
    %c1_9 = arith.constant 1 : index
    %22 = memref.load %arg1[%c1_8, %c1_9] : memref<2x3xf32, #tpu.memory_space<smem>>
    %23 = vector.extract_strided_slice %0 {offsets = [1, 0], sizes = [1, 8], strides = [1, 1]} : vector<3x8xf32> to vector<1x8xf32>
    %24 = vector.broadcast %22 : f32 to vector<1x8xf32>
    %25 = arith.mulf %24, %23 : vector<1x8xf32>
    %26 = arith.addf %21, %25 : vector<1x8xf32>
    %c1_10 = arith.constant 1 : index
    %c2_11 = arith.constant 2 : index
    %27 = memref.load %arg1[%c1_10, %c2_11] : memref<2x3xf32, #tpu.memory_space<smem>>
    %28 = vector.extract_strided_slice %0 {offsets = [2, 0], sizes = [1, 8], strides = [1, 1]} : vector<3x8xf32> to vector<1x8xf32>
    %29 = vector.broadcast %27 : f32 to vector<1x8xf32>
    %30 = arith.mulf %29, %28 : vector<1x8xf32>
    %31 = arith.addf %26, %30 : vector<1x8xf32>
    %c1_12 = arith.constant 1 : index
    %32 = memref.load %arg2[%c1_12] : memref<2xf32, #tpu.memory_space<smem>>
    %33 = vector.broadcast %32 : f32 to vector<1x8xf32>
    %34 = arith.addf %31, %33 : vector<1x8xf32>
    %35 = tpu.concatenate %17, %34 in 0 : vector<1x8xf32>, vector<1x8xf32> -> vector<2x8xf32>
    %c0_13 = arith.constant 0 : index
    %c0_14 = arith.constant 0 : index
    %36 = vector.load %arg4[%c0_13, %c0_14] : memref<2x8xf32, #tpu.memory_space<vmem>>, vector<2x8xf32>
    tpu.vector_store %arg4[%c0_13, %c0_14], %35 {strides = array<i32>} : memref<2x8xf32, #tpu.memory_space<vmem>>, vector<2x8xf32>,
    return
  }
  func.func @transform_0(%arg0: i32) -> (i32, i32) {
    %c0_i32 = arith.constant 0 : i32
    %c0_i32_0 = arith.constant 0 : i32
    %c0_i32_1 = arith.constant 0 : i32
    return %c0_i32, %c0_i32_0 : i32, i32
  }
  func.func @transform_1(%arg0: i32) -> i32 {
    %c0_i32 = arith.constant 0 : i32
    %c0_i32_0 = arith.constant 0 : i32
    return %c0_i32 : i32
  }
  func.func @transform_2(%arg0: i32) -> (i32, i32) {
    %c0_i32 = arith.constant 0 : i32
    %c0_i32_0 = arith.constant 0 : i32
    return %c0_i32, %arg0 : i32, i32
  }
  func.func @transform_3(%arg0: i32) -> (i32, i32) {
    %c0_i32 = arith.constant 0 : i32
    %c0_i32_0 = arith.constant 0 : i32
    return %c0_i32, %arg0 : i32, i32
  }
}

</mosaic_0001>

<llo_original>
// kernel: linear_forward.1
$region0: #{linear_forward.1}
  #allocation0 [shape = 'u32[]', space=smem, size = 0x4, offset = 0x4, fixed_abs, tag = 'smem constant byte address 0x4 - core index']
  #allocation1 [shape = 'u32[144,128]{1,0:T(1,128)}', space=vmem, size = 0x12000, scoped, tag = 'internal scratch']
  %s0 = inlined_call_operand.vmem [shape: f32[2,3], index: 0, kind: input, shape index: {}]
  %s1 = inlined_call_operand.vmem [shape: f32[2], index: 1, kind: input, shape index: {}]
  %s2 = inlined_call_operand.hbm [shape: f32[3,8], index: 2, kind: input, shape index: {}]
  %s3 = inlined_call_operand.hbm [shape: f32[2,8], index: 3, kind: output, shape index: {}]
  %s4 = sld [smem:[#allocation0]]
  $region34: #{linear_forward.1} parent=0
    _
  %s6 = ssub.s32 1, %s4
  %s7 = scalar_select 0, %s6, %s4
  $region1: #{linear_forward.1} parent=0
    #allocation2 [shape = 'u8[1024]{0}', space=smem, size = 0x400, scoped, tag = 'input window, operand 0, single buffered']
    #allocation3 [shape = 's32[1]{0}', space=sflag, size = 0x4, scoped, tag = 'scoped memory for linear_forward.1']
    #allocation4 [shape = 's32[1]{0}', space=sflag, size = 0x4, scoped, tag = 'scoped memory for linear_forward.1']
    #allocation5 [shape = 's32[1]{0}', space=sflag, size = 0x4, scoped, tag = 'scoped memory for linear_forward.1']
    #allocation6 [shape = 'u8[512]{0}', space=smem, size = 0x200, scoped, tag = 'input window, operand 1, single buffered']
    #allocation7 [shape = 's32[1]{0}', space=sflag, size = 0x4, scoped, tag = 'scoped memory for linear_forward.1']
    #allocation8 [shape = 'u8[2048]{0}', space=vmem, size = 0x800, scoped, tag = 'input window, operand 2, single buffered']
    #allocation9 [shape = 'u8[1024]{0}', space=vmem, size = 0x400, scoped, tag = 'output window, operand 0, single buffered']
    %8 = vsyncpa [#allocation5], 0
    %9 = vsyncpa [#allocation7], 0
    %10 = vsyncpa [#allocation3], 0
    %11 = vsyncpa [#allocation4], 0
    // Predicated region
    $region2: #{linear_forward.1} parent=1 // pred_check
      _
    $region3: #{linear_forward.1} parent=1 // pred_check_branch
      %13 = sbr.rel (0) target = $region5
    $region4: #{linear_forward.1} parent=1 // pred_region
      %s15 = ssub.s32 32, 32
      %16 = vsyncadd [#allocation5], %s15
      %s18 = sshll.u32 %s0, 4
      %s19 = int_to_ptr.vmem [resolvable:$true] %s18
      %21 = dma.vmem_to_smem %s19, 32, [#allocation2], [#allocation5]
    $region5: #{linear_forward.1} parent=1 // pred_fallthru
      _
    // Predicated region
    $region6: #{linear_forward.1} parent=1 // pred_check
      _
    $region7: #{linear_forward.1} parent=1 // pred_check_branch
      %23 = sbr.rel (0) target = $region9
    $region8: #{linear_forward.1} parent=1 // pred_region
      %s25 = ssub.s32 16, 16
      %26 = vsyncadd [#allocation7], %s25
      %s28 = sshll.u32 %s1, 4
      %s29 = int_to_ptr.vmem [resolvable:$true] %s28
      %31 = dma.vmem_to_smem %s29, 16, [#allocation6], [#allocation7]
    $region9: #{linear_forward.1} parent=1 // pred_fallthru
      _
    // Predicated region
    $region10: #{linear_forward.1} parent=1 // pred_check
      _
    $region11: #{linear_forward.1} parent=1 // pred_check_branch
      %33 = sbr.rel (0) target = $region13
    $region12: #{linear_forward.1} parent=1 // pred_region
      %s35 = ssub.s32 64, 64
      %36 = vsyncadd [#allocation3], %s35
      %s38 = sshll.u32 [#allocation8], 4
      %s39 = int_to_ptr.vmem [resolvable:$true] %s38
      %41 = dma.hbm_to_vmem [thread:$0]  %s2, 64, %s39, [#allocation3]
    $region13: #{linear_forward.1} parent=1 // pred_fallthru
      _
    // Predicated region
    $region14: #{linear_forward.1} parent=1 // pred_check
      _
    $region15: #{linear_forward.1} parent=1 // pred_check_branch
      %43 = sbr.rel (0) target = $region17
    $region16: #{linear_forward.1} parent=1 // pred_region
      %44 = dma.done [#allocation5], 32
    $region17: #{linear_forward.1} parent=1 // pred_fallthru
      _
    // Predicated region
    $region18: #{linear_forward.1} parent=1 // pred_check
      _
    $region19: #{linear_forward.1} parent=1 // pred_check_branch
      %46 = sbr.rel (0) target = $region21
    $region20: #{linear_forward.1} parent=1 // pred_region
      %47 = dma.done [#allocation7], 16
    $region21: #{linear_forward.1} parent=1 // pred_fallthru
      _
    // Predicated region
    $region22: #{linear_forward.1} parent=1 // pred_check
      _
    $region23: #{linear_forward.1} parent=1 // pred_check_branch
      %49 = sbr.rel (0) target = $region25
    $region24: #{linear_forward.1} parent=1 // pred_region
      %50 = dma.done [#allocation3], 64
    $region25: #{linear_forward.1} parent=1 // pred_fallthru
      _
    %51 = sfence
    %v52 = vld [vmem:[#allocation8] sm:$0x7]
    %s53 = sld [smem:[#allocation2]]
    %v54 = vstv %s53
    %v55 = vmul.f32 %v54, %v52
    %s56 = sld [smem:[#allocation2 + $0x1]]
    %v57 = vstv %s56
    %v58 = vmul.f32 %v57, %v52
    %v60 = vrot.slane %v58, 1
    %v62 = vadd.f32 %v55, %v60
    %s63 = sld [smem:[#allocation2 + $0x2]]
    %v64 = vstv %s63
    %v65 = vmul.f32 %v64, %v52
    %v67 = vrot.slane %v65, 2
    %v69 = vadd.f32 %v62, %v67
    %s70 = sld [smem:[#allocation6]]
    %v71 = vstv %s70
    %v72 = vadd.f32 %v69, %v71
    %s73 = sld [smem:[#allocation2 + $0x80]]
    %v74 = vstv %s73
    %v75 = vmul.f32 %v74, %v52
    %s76 = sld [smem:[#allocation2 + $0x81]]
    %v77 = vstv %s76
    %v78 = vmul.f32 %v77, %v52
    %v80 = vrot.slane %v78, 1
    %v82 = vadd.f32 %v75, %v80
    %s83 = sld [smem:[#allocation2 + $0x82]]
    %v84 = vstv %s83
    %v85 = vmul.f32 %v84, %v52
    %v87 = vrot.slane %v85, 2
    %v89 = vadd.f32 %v82, %v87
    %s90 = sld [smem:[#allocation6 + $0x1]]
    %v91 = vstv %s90
    %v92 = vadd.f32 %v89, %v91
    %v94 = vrot.slane %v92, 7
    %vm96 = vcmask 1040384
    %v97 = vsel %vm96, %v72, %v94
    %vm98 = vcmask 58368
    %99 = vst.msk [vmem:[#allocation9] sm:$0x3] %vm98, %v97
    // Predicated region
    $region26: #{linear_forward.1} parent=1 // pred_check
      _
    $region27: #{linear_forward.1} parent=1 // pred_check_branch
      %101 = sbr.rel (0) target = $region29
    $region28: #{linear_forward.1} parent=1 // pred_region
      %s103 = ssub.s32 32, 32
      %104 = vsyncadd [#allocation4], %s103
      %s106 = sshll.u32 [#allocation9], 4
      %s107 = int_to_ptr.vmem [resolvable:$true] %s106
      %109 = dma.vmem_to_hbm [thread:$0]  %s107, 32, %s3, [#allocation4]
    $region29: #{linear_forward.1} parent=1 // pred_fallthru
      _
    // Predicated region
    $region30: #{linear_forward.1} parent=1 // pred_check
      _
    $region31: #{linear_forward.1} parent=1 // pred_check_branch
      %111 = sbr.rel (0) target = $region33
    $region32: #{linear_forward.1} parent=1 // pred_region
      %112 = dma.done [#allocation4], 32
    $region33: #{linear_forward.1} parent=1 // pred_fallthru
      _
    %113 = vsyncpa [#allocation3], 1
    %114 = vsyncpa [#allocation4], 1
    %115 = vsyncpa [#allocation5], 1
    %116 = vsyncpa [#allocation7], 1

</llo_original>
